<compile_context>
chip_gen: v7x
topology: tpu7x:2x2x1
jax: 0.10.0
libtpu: 0.0.40
codegen_flags: <defaults>
</compile_context>

<pallas_src>
import functools
import math

import jax
import jax.numpy as jnp
from jax.experimental import pallas as pl
from jax.experimental.pallas import tpu as pltpu


def _round_up(x, m):
    return ((x + m - 1) // m) * m


# ------------------------------ fused kernel -------------------------------

def _make_fused_kernel(n_layers):
    """Fused forward kernel for a fixed (trace-time) layer count.

    Ref layout:
      xfw_ref : [B, D_pad]              x in cols [0:indim], fw in
                                        [indim:indim+nb_fw], zeros after.
      w_ref   : [n_layers, D_pad, D_pad]  blockdiag(W_i, W_fw_i), zero padded.
      v_ref   : [n_layers + 2, D_pad]
                  rows 0..n_layers-1 : fused biases [b_i | b_fw_i | 0]
                  row  n_layers      : [wc | wc | 0]  (classify weight, dup'd)
                  row  n_layers + 1  : classify bias at col 0
      o_ref   : [B, 1]
    """

    def kernel(xfw_ref, w_ref, v_ref, o_ref):
        act = xfw_ref[...]                                   # [B, D_pad]

        # Both branches of each layer in ONE lane-full MXU matmul
        # (block-diagonal weight); fully unrolled at trace time, activations
        # never leave VMEM / vregs.
        for i in range(n_layers):
            w = w_ref[i]                                     # [D_pad, D_pad]
            b = v_ref[pl.ds(i, 1), :]                        # [1, D_pad]
            act = jnp.maximum(
                jnp.dot(act, w, preferred_element_type=jnp.float32) + b, 0.0
            )

        # classify(h + g): with wc duplicated, sum(act * [wc|wc|0], -1)
        # == h@wc + g@wc == (h + g)@wc.  1-wide output -> VPU multiply +
        # lane reduce instead of a 1-lane (masked-store) MXU matmul.
        wc = v_ref[pl.ds(n_layers, 1), :]                    # [1, D_pad]
        bc = v_ref[pl.ds(n_layers + 1, 1), pl.ds(0, 1)]      # [1, 1]
        logits = jnp.sum(act * wc, axis=-1, keepdims=True) + bc
        o_ref[...] = jax.nn.sigmoid(logits).astype(o_ref.dtype)

    return kernel


def j2_net_forward(w_packed, v_packed, x, fw, *, indim, nb_fw):
    """Fused forward pass: one pallas_call for the entire network."""
    B = x.shape[0]
    n_layers, d_pad, _ = w_packed.shape

    # Single packed activation input [x | fw | 0-pad] -> one input DMA.
    xfw = jnp.zeros((B, d_pad), jnp.float32)
    xfw = xfw.at[:, :indim].set(x).at[:, indim:indim + nb_fw].set(fw)

    # TODO(synk): large-batch path -- add grid=(B // TB,) over the batch dim
    # (TB >= 512 rows), pin the weight BlockSpecs with constant index_maps,
    # set dimension_semantics=("parallel",) (needed to use both v7x
    # TensorCores), cast matmul operands to bf16 (f32 accumulate), and emit a
    # lane-dense logits slab instead of the (B, 1) masked store.  Not needed
    # at B=8 where everything fits one grid step.
    return pl.pallas_call(
        _make_fused_kernel(n_layers),
        out_shape=jax.ShapeDtypeStruct((B, 1), jnp.float32),
        in_specs=[pl.BlockSpec(memory_space=pltpu.MemorySpace.VMEM)] * 3,
        out_specs=pl.BlockSpec(memory_space=pltpu.MemorySpace.VMEM),
    )(xfw, w_packed, v_packed)


# ------------------------- parameter init & packing ------------------------

def _init_linear(key, d_in, d_out):
    """PyTorch-style init: U(-1/sqrt(d_in), 1/sqrt(d_in)).

    Returns weight already transposed to [d_in, d_out] and bias as [1, d_out].
    """
    k_w, k_b = jax.random.split(key)
    bound = 1.0 / math.sqrt(d_in)
    w_t = jax.random.uniform(k_w, (d_in, d_out), jnp.float32, -bound, bound)
    b = jax.random.uniform(k_b, (1, d_out), jnp.float32, -bound, bound)
    return w_t, b


def init_j2_net_params(key, layers, indim=8, nb_fw=50):
    params = {"layers": [], "fwlayers": []}
    d_prev = indim
    for d_out in layers:
        key, sub = jax.random.split(key)
        params["layers"].append(_init_linear(sub, d_prev, d_out))
        d_prev = d_out
    d_prev = nb_fw
    for d_out in layers:
        key, sub = jax.random.split(key)
        params["fwlayers"].append(_init_linear(sub, d_prev, d_out))
        d_prev = d_out
    key, sub = jax.random.split(key)
    params["classify"] = _init_linear(sub, layers[-1], 1)
    return params


def pack_j2_net_params(params, layers, indim, nb_fw):
    """One-time packing into 2 buffers: block-diag weights + bias/classify rows."""
    n_layers = len(layers)
    d_pad = _round_up(max(2 * max(layers), indim + nb_fw), 128)

    w_blocks = []
    v_rows = []
    for i in range(n_layers):
        w_a, b_a = params["layers"][i]        # [din_a, dout], [1, dout]
        w_b, b_b = params["fwlayers"][i]      # [din_b, dout], [1, dout]
        dout = layers[i]
        if i == 0:
            din_a, din_b, row_b = indim, nb_fw, indim
        else:
            din_a = din_b = layers[i - 1]
            row_b = layers[i - 1]
        W = jnp.zeros((d_pad, d_pad), jnp.float32)
        W = W.at[0:din_a, 0:dout].set(w_a)
        W = W.at[row_b:row_b + din_b, dout:2 * dout].set(w_b)
        w_blocks.append(W)

        brow = jnp.zeros((d_pad,), jnp.float32)
        brow = brow.at[0:dout].set(b_a[0]).at[dout:2 * dout].set(b_b[0])
        v_rows.append(brow)

    wc_t, bc = params["classify"]             # [layers[-1], 1], [1, 1]
    d_last = layers[-1]
    wc = wc_t[:, 0]
    wc_row = jnp.zeros((d_pad,), jnp.float32)
    wc_row = wc_row.at[0:d_last].set(wc).at[d_last:2 * d_last].set(wc)
    v_rows.append(wc_row)
    v_rows.append(jnp.zeros((d_pad,), jnp.float32).at[0].set(bc[0, 0]))

    w_packed = jnp.stack(w_blocks)            # [n_layers, d_pad, d_pad]
    v_packed = jnp.stack(v_rows)              # [n_layers + 2, d_pad]
    return w_packed, v_packed


# ------------------------------------ main ---------------------------------

if __name__ == "__main__":
    key = jax.random.PRNGKey(0)

    # small shapes consistent with the module defaults
    B = 8
    indim = 8
    nb_fw = 50
    layers = [32, 64]

    k_params, k_x, k_fw = jax.random.split(key, 3)
    params = init_j2_net_params(k_params, layers, indim=indim, nb_fw=nb_fw)
    w_packed, v_packed = pack_j2_net_params(params, layers, indim, nb_fw)
    w_packed = jax.block_until_ready(w_packed)
    v_packed = jax.block_until_ready(v_packed)

    x = jax.random.normal(k_x, (B, indim), jnp.float32)
    fw = jax.random.normal(k_fw, (B, nb_fw), jnp.float32)

    fwd = jax.jit(functools.partial(j2_net_forward, indim=indim, nb_fw=nb_fw))
    out = jax.block_until_ready(fwd(w_packed, v_packed, x, fw))

    # reference check in plain JAX (same math as the PyTorch module, BN=False)
    def ref_forward(params, x, fw):
        h = x
        for (w_t, b) in params["layers"]:
            h = jnp.maximum(h @ w_t + b, 0.0)
        g = fw
        for (w_t, b) in params["fwlayers"]:
            g = jnp.maximum(g @ w_t + b, 0.0)
        wc_t, bc = params["classify"]
        return jax.nn.sigmoid((h + g) @ wc_t + bc)

    ref = ref_forward(params, x, fw)
    assert out.shape == (B, 1)
    assert jnp.allclose(out, ref, atol=1e-5, rtol=1e-5), float(
        jnp.max(jnp.abs(out - ref))
    )

    print("KERNEL_OK")
</pallas_src>

<mosaic_0001>
module attributes {stable_mosaic.version = 11 : i64} {
  func.func @kernel(%arg0: memref<8x128xf32, #tpu.memory_space<vmem>>, %arg1: memref<2x128x128xf32, #tpu.memory_space<vmem>>, %arg2: memref<4x128xf32, #tpu.memory_space<vmem>>, %arg3: memref<8x1xf32, #tpu.memory_space<vmem>>) attributes {dimension_semantics = [], scalar_prefetch = 0 : i64, scratch_operands = 0 : i64, tpu.core_type = #tpu.core_type<tc>} {
    %c0 = arith.constant 0 : index
    %c0_0 = arith.constant 0 : index
    %0 = vector.load %arg0[%c0, %c0_0] : memref<8x128xf32, #tpu.memory_space<vmem>>, vector<8x128xf32>
    %c0_1 = arith.constant 0 : index
    %c0_2 = arith.constant 0 : index
    %c0_3 = arith.constant 0 : index
    %1 = vector.load %arg1[%c0_1, %c0_2, %c0_3] : memref<2x128x128xf32, #tpu.memory_space<vmem>>, vector<1x128x128xf32>
    %2 = vector.shape_cast %1 : vector<1x128x128xf32> to vector<128x128xf32>
    %c0_4 = arith.constant 0 : index
    %c0_5 = arith.constant 0 : index
    %3 = vector.load %arg2[%c0_4, %c0_5] : memref<4x128xf32, #tpu.memory_space<vmem>>, vector<1x128xf32>
    %cst = arith.constant dense<0.000000e+00> : vector<8x128xf32>
    %4 = tpu.matmul %0, %2, %cst {dimension_numbers = #tpu.dot_dimension_numbers<[1], [0], [0], [1], [0, 0, 1, 1], [], []>} : vector<8x128xf32>, vector<128x128xf32>, vector<8x128xf32> -> vector<8x128xf32>
    %5 = vector.broadcast %3 : vector<1x128xf32> to vector<8x128xf32>
    %6 = arith.addf %4, %5 : vector<8x128xf32>
    %cst_6 = arith.constant 0.000000e+00 : f32
    %7 = vector.broadcast %cst_6 : f32 to vector<8x128xf32>
    %8 = arith.maximumf %6, %7 : vector<8x128xf32>
    %c1 = arith.constant 1 : index
    %c0_7 = arith.constant 0 : index
    %c0_8 = arith.constant 0 : index
    %9 = vector.load %arg1[%c1, %c0_7, %c0_8] : memref<2x128x128xf32, #tpu.memory_space<vmem>>, vector<1x128x128xf32>
    %10 = vector.shape_cast %9 : vector<1x128x128xf32> to vector<128x128xf32>
    %c1_9 = arith.constant 1 : index
    %c0_10 = arith.constant 0 : index
    %11 = vector.load %arg2[%c1_9, %c0_10] : memref<4x128xf32, #tpu.memory_space<vmem>>, vector<1x128xf32>
    %cst_11 = arith.constant dense<0.000000e+00> : vector<8x128xf32>
    %12 = tpu.matmul %8, %10, %cst_11 {dimension_numbers = #tpu.dot_dimension_numbers<[1], [0], [0], [1], [0, 0, 1, 1], [], []>} : vector<8x128xf32>, vector<128x128xf32>, vector<8x128xf32> -> vector<8x128xf32>
    %13 = vector.broadcast %11 : vector<1x128xf32> to vector<8x128xf32>
    %14 = arith.addf %12, %13 : vector<8x128xf32>
    %cst_12 = arith.constant 0.000000e+00 : f32
    %15 = vector.broadcast %cst_12 : f32 to vector<8x128xf32>
    %16 = arith.maximumf %14, %15 : vector<8x128xf32>
    %c2 = arith.constant 2 : index
    %c0_13 = arith.constant 0 : index
    %17 = vector.load %arg2[%c2, %c0_13] : memref<4x128xf32, #tpu.memory_space<vmem>>, vector<1x128xf32>
    %c3 = arith.constant 3 : index
    %c0_14 = arith.constant 0 : index
    %18 = vector.load %arg2[%c3, %c0_14] : memref<4x128xf32, #tpu.memory_space<vmem>>, vector<1x1xf32>
    %19 = vector.broadcast %17 : vector<1x128xf32> to vector<8x128xf32>
    %20 = arith.mulf %16, %19 : vector<8x128xf32>
    %cst_15 = arith.constant dense<0.000000e+00> : vector<8xf32>
    %21 = vector.multi_reduction <add>, %20, %cst_15 [1] : vector<8x128xf32> to vector<8xf32>
    %22 = vector.shape_cast %21 : vector<8xf32> to vector<8x1xf32>
    %23 = vector.broadcast %18 : vector<1x1xf32> to vector<8x1xf32>
    %24 = arith.addf %22, %23 : vector<8x1xf32>
    %25 = arith.negf %24 : vector<8x1xf32>
    %26 = math.exp %25 : vector<8x1xf32>
    %cst_16 = arith.constant 1.000000e+00 : f32
    %27 = vector.broadcast %cst_16 : f32 to vector<8x1xf32>
    %28 = arith.addf %27, %26 : vector<8x1xf32>
    %29 = arith.divf %27, %28 : vector<8x1xf32>
    %c0_17 = arith.constant 0 : index
    %c0_18 = arith.constant 0 : index
    %30 = vector.load %arg3[%c0_17, %c0_18] : memref<8x1xf32, #tpu.memory_space<vmem>>, vector<8x1xf32>
    tpu.vector_store %arg3[%c0_17, %c0_18], %29 {strides = array<i32>} : memref<8x1xf32, #tpu.memory_space<vmem>>, vector<8x1xf32>,
    return
  }
}

</mosaic_0001>

<llo_original>
// kernel: j2_net_forward.1
$region0: #{j2_net_forward.1}
  #allocation0 [shape = 'u32[]', space=smem, size = 0x4, offset = 0x4, fixed_abs, tag = 'smem constant byte address 0x4 - core index']
  #allocation1 [shape = 'u32[144,128]{1,0:T(1,128)}', space=vmem, size = 0x12000, scoped, tag = 'internal scratch']
  %s0 = inlined_call_operand.vmem [shape: f32[8,128], index: 0, kind: input, shape index: {}]
  %s1 = inlined_call_operand.hbm [shape: f32[2,128,128], index: 1, kind: input, shape index: {}]
  %s2 = inlined_call_operand.vmem [shape: f32[4,128], index: 2, kind: input, shape index: {}]
  %s3 = inlined_call_operand.vmem [shape: f32[8,1], index: 3, kind: output, shape index: {}]
  %s4 = sld [smem:[#allocation0]]
  $region26: #{j2_net_forward.1} parent=0
    _
  %s6 = ssub.s32 1, %s4
  %s7 = scalar_select 0, %s6, %s4
  $region1: #{j2_net_forward.1} parent=0
    #allocation2 [shape = 'u8[131072]{0}', space=vmem, size = 0x20000, scoped, tag = 'input window, operand 1, single buffered']
    #allocation3 [shape = 's32[1]{0}', space=sflag, size = 0x4, scoped, tag = 'scoped memory for j2_net_forward.1']
    %8 = vsyncpa [#allocation3], 0
    // Predicated region
    $region2: #{j2_net_forward.1} parent=1 // pred_check
      _
    $region3: #{j2_net_forward.1} parent=1 // pred_check_branch
      %10 = sbr.rel (0) target = $region5
    $region4: #{j2_net_forward.1} parent=1 // pred_region
      _
    $region5: #{j2_net_forward.1} parent=1 // pred_fallthru
      _
    // Predicated region
    $region6: #{j2_net_forward.1} parent=1 // pred_check
      _
    $region7: #{j2_net_forward.1} parent=1 // pred_check_branch
      %12 = sbr.rel (0) target = $region9
    $region8: #{j2_net_forward.1} parent=1 // pred_region
      %s14 = ssub.s32 4096, 4096
      %15 = vsyncadd [#allocation3], %s14
      %s16 = sshll.u32 [#allocation2], 4
      %s17 = int_to_ptr.vmem [resolvable:$true] %s16
      %22 = dma.hbm_to_vmem [thread:$0]  %s1, 4096, %s17, [#allocation3], 128, 128, 8
    $region9: #{j2_net_forward.1} parent=1 // pred_fallthru
      _
    // Predicated region
    $region10: #{j2_net_forward.1} parent=1 // pred_check
      _
    $region11: #{j2_net_forward.1} parent=1 // pred_check_branch
      %24 = sbr.rel (0) target = $region13
    $region12: #{j2_net_forward.1} parent=1 // pred_region
      _
    $region13: #{j2_net_forward.1} parent=1 // pred_fallthru
      _
    // Predicated region
    $region14: #{j2_net_forward.1} parent=1 // pred_check
      _
    $region15: #{j2_net_forward.1} parent=1 // pred_check_branch
      %26 = sbr.rel (0) target = $region17
    $region16: #{j2_net_forward.1} parent=1 // pred_region
      %27 = dma.done [#allocation3], 4096
    $region17: #{j2_net_forward.1} parent=1 // pred_fallthru
      _
    %v28 = vld [vmem:[%s0] sm:$0xff]
    %v29 = vld [vmem:[#allocation2] sm:$0xff]
    %v30 = vld [vmem:[#allocation2 + $0x8] sm:$0xff]
    %v31 = vld [vmem:[#allocation2 + $0x10] sm:$0xff]
    %v32 = vld [vmem:[#allocation2 + $0x18] sm:$0xff]
    %v33 = vld [vmem:[#allocation2 + $0x20] sm:$0xff]
    %v34 = vld [vmem:[#allocation2 + $0x28] sm:$0xff]
    %v35 = vld [vmem:[#allocation2 + $0x30] sm:$0xff]
    %v36 = vld [vmem:[#allocation2 + $0x38] sm:$0xff]
    %v37 = vld [vmem:[#allocation2 + $0x40] sm:$0xff]
    %v38 = vld [vmem:[#allocation2 + $0x48] sm:$0xff]
    %v39 = vld [vmem:[#allocation2 + $0x50] sm:$0xff]
    %v40 = vld [vmem:[#allocation2 + $0x58] sm:$0xff]
    %v41 = vld [vmem:[#allocation2 + $0x60] sm:$0xff]
    %v42 = vld [vmem:[#allocation2 + $0x68] sm:$0xff]
    %v43 = vld [vmem:[#allocation2 + $0x70] sm:$0xff]
    %v44 = vld [vmem:[#allocation2 + $0x78] sm:$0xff]
    %v45 = vld [vmem:[%s2] sm:$0x1]
    %v46 = vlaneseq
    %v47 = vshrl.u32 %v46, 7
    %v48 = vsub.s32 0, %v47
    %v49 = vrot.slane %v45, %v48
    %50 = vmatprep.subr.mxu0 0.0
    %51 = vmatpush1.msra.mxu0 %v29
    %52 = vmatprep.subr.mxu0 0.0
    %53 = vmatpush1.msra.mxu0 %v30
    %54 = vmatprep.subr.mxu0 0.0
    %55 = vmatpush1.msra.mxu0 %v31
    %56 = vmatprep.subr.mxu0 0.0
    %57 = vmatpush1.msra.mxu0 %v32
    %58 = vmatprep.subr.mxu0 0.0
    %59 = vmatpush1.msra.mxu0 %v33
    %60 = vmatprep.subr.mxu0 0.0
    %61 = vmatpush1.msra.mxu0 %v34
    %62 = vmatprep.subr.mxu0 0.0
    %63 = vmatpush1.msra.mxu0 %v35
    %64 = vmatprep.subr.mxu0 0.0
    %65 = vmatpush1.msra.mxu0 %v36
    %66 = vmatprep.subr.mxu0 0.0
    %67 = vmatpush1.msra.mxu0 %v37
    %68 = vmatprep.subr.mxu0 0.0
    %69 = vmatpush1.msra.mxu0 %v38
    %70 = vmatprep.subr.mxu0 0.0
    %71 = vmatpush1.msra.mxu0 %v39
    %72 = vmatprep.subr.mxu0 0.0
    %73 = vmatpush1.msra.mxu0 %v40
    %74 = vmatprep.subr.mxu0 0.0
    %75 = vmatpush1.msra.mxu0 %v41
    %76 = vmatprep.subr.mxu0 0.0
    %77 = vmatpush1.msra.mxu0 %v42
    %78 = vmatprep.subr.mxu0 0.0
    %79 = vmatpush1.msra.mxu0 %v43
    %80 = vmatprep.subr.mxu0 0.0
    %81 = vmatpush1.msra.mxu0 %v44
    %82 = vmatprep.subr.mxu0 0.0
    %83 = vmatpush1.msra.mxu0 0.0
    %84 = vmatprep.subr.mxu0 0.0
    %85 = vmatpush1.msra.mxu0 0.0
    %86 = vmatprep.subr.mxu0 0.0
    %87 = vmatpush1.msra.mxu0 0.0
    %88 = vmatprep.subr.mxu0 0.0
    %89 = vmatpush1.msra.mxu0 0.0
    %90 = vmatprep.subr.mxu0 0.0
    %91 = vmatpush1.msra.mxu0 0.0
    %92 = vmatprep.subr.mxu0 0.0
    %93 = vmatpush1.msra.mxu0 0.0
    %94 = vmatprep.subr.mxu0 0.0
    %95 = vmatpush1.msra.mxu0 0.0
    %96 = vmatprep.subr.mxu0 0.0
    %97 = vmatpush1.msra.mxu0 0.0
    %98 = vmatprep.subr.mxu0 0.0
    %99 = vmatpush1.msra.mxu0 0.0
    %100 = vmatprep.subr.mxu0 0.0
    %101 = vmatpush1.msra.mxu0 0.0
    %102 = vmatprep.subr.mxu0 0.0
    %103 = vmatpush1.msra.mxu0 0.0
    %104 = vmatprep.subr.mxu0 0.0
    %105 = vmatpush1.msra.mxu0 0.0
    %106 = vmatprep.subr.mxu0 0.0
    %107 = vmatpush1.msra.mxu0 0.0
    %108 = vmatprep.subr.mxu0 0.0
    %109 = vmatpush1.msra.mxu0 0.0
    %110 = vmatprep.subr.mxu0 0.0
    %111 = vmatpush1.msra.mxu0 0.0
    %112 = vmatprep.subr.mxu0 0.0
    %113 = vmatpush1.msra.mxu0 0.0
    %114 = vmatprep.mubr.f32.mxu0 0.0
    %115 = vmatmul.mubr.f32.gmra.mrb[0].mxu0 %v28
    %v116 = vpop.f32.mrb[0].mxu0
    %v117 = vadd.f32 %v49, %v116
    %v118 = vpop.f32.mrb[0].mxu0
    %119 = vdwg.mxu0
    %v120 = vmax.f32 %v117, 0.0
    %s121 = scalar_lea.vmem [#allocation2], 128
    %v122 = vld [vmem:[%s121] sm:$0xff]
    %v123 = vld [vmem:[%s121 + $0x8] sm:$0xff]
    %v124 = vld [vmem:[%s121 + $0x10] sm:$0xff]
    %v125 = vld [vmem:[%s121 + $0x18] sm:$0xff]
    %v126 = vld [vmem:[%s121 + $0x20] sm:$0xff]
    %v127 = vld [vmem:[%s121 + $0x28] sm:$0xff]
    %v128 = vld [vmem:[%s121 + $0x30] sm:$0xff]
    %v129 = vld [vmem:[%s121 + $0x38] sm:$0xff]
    %v130 = vld [vmem:[%s121 + $0x40] sm:$0xff]
    %v131 = vld [vmem:[%s121 + $0x48] sm:$0xff]
    %v132 = vld [vmem:[%s121 + $0x50] sm:$0xff]
    %v133 = vld [vmem:[%s121 + $0x58] sm:$0xff]
    %v134 = vld [vmem:[%s121 + $0x60] sm:$0xff]
    %v135 = vld [vmem:[%s121 + $0x68] sm:$0xff]
    %v136 = vld [vmem:[%s121 + $0x70] sm:$0xff]
    %v137 = vld [vmem:[%s121 + $0x78] sm:$0xff]
    %v138 = vld [vmem:[%s2 + $0x1] sm:$0x1]
    %v139 = vlaneseq
    %v140 = vshrl.u32 %v139, 7
    %v141 = vsub.s32 0, %v140
    %v142 = vrot.slane %v138, %v141
    %143 = vmatprep.subr.mxu0 0.0
    %144 = vmatpush1.msra.mxu0 %v122
    %145 = vmatprep.subr.mxu0 0.0
    %146 = vmatpush1.msra.mxu0 %v123
    %147 = vmatprep.subr.mxu0 0.0
    %148 = vmatpush1.msra.mxu0 %v124
    %149 = vmatprep.subr.mxu0 0.0
    %150 = vmatpush1.msra.mxu0 %v125
    %151 = vmatprep.subr.mxu0 0.0
    %152 = vmatpush1.msra.mxu0 %v126
    %153 = vmatprep.subr.mxu0 0.0
    %154 = vmatpush1.msra.mxu0 %v127
    %155 = vmatprep.subr.mxu0 0.0
    %156 = vmatpush1.msra.mxu0 %v128
    %157 = vmatprep.subr.mxu0 0.0
    %158 = vmatpush1.msra.mxu0 %v129
    %159 = vmatprep.subr.mxu0 0.0
    %160 = vmatpush1.msra.mxu0 %v130
    %161 = vmatprep.subr.mxu0 0.0
    %162 = vmatpush1.msra.mxu0 %v131
    %163 = vmatprep.subr.mxu0 0.0
    %164 = vmatpush1.msra.mxu0 %v132
    %165 = vmatprep.subr.mxu0 0.0
    %166 = vmatpush1.msra.mxu0 %v133
    %167 = vmatprep.subr.mxu0 0.0
    %168 = vmatpush1.msra.mxu0 %v134
    %169 = vmatprep.subr.mxu0 0.0
    %170 = vmatpush1.msra.mxu0 %v135
    %171 = vmatprep.subr.mxu0 0.0
    %172 = vmatpush1.msra.mxu0 %v136
    %173 = vmatprep.subr.mxu0 0.0
    %174 = vmatpush1.msra.mxu0 %v137
    %175 = vmatprep.subr.mxu0 0.0
    %176 = vmatpush1.msra.mxu0 0.0
    %177 = vmatprep.subr.mxu0 0.0
    %178 = vmatpush1.msra.mxu0 0.0
    %179 = vmatprep.subr.mxu0 0.0
    %180 = vmatpush1.msra.mxu0 0.0
    %181 = vmatprep.subr.mxu0 0.0
    %182 = vmatpush1.msra.mxu0 0.0
    %183 = vmatprep.subr.mxu0 0.0
    %184 = vmatpush1.msra.mxu0 0.0
    %185 = vmatprep.subr.mxu0 0.0
    %186 = vmatpush1.msra.mxu0 0.0
    %187 = vmatprep.subr.mxu0 0.0
    %188 = vmatpush1.msra.mxu0 0.0
    %189 = vmatprep.subr.mxu0 0.0
    %190 = vmatpush1.msra.mxu0 0.0
    %191 = vmatprep.subr.mxu0 0.0
    %192 = vmatpush1.msra.mxu0 0.0
    %193 = vmatprep.subr.mxu0 0.0
    %194 = vmatpush1.msra.mxu0 0.0
    %195 = vmatprep.subr.mxu0 0.0
    %196 = vmatpush1.msra.mxu0 0.0
    %197 = vmatprep.subr.mxu0 0.0
    %198 = vmatpush1.msra.mxu0 0.0
    %199 = vmatprep.subr.mxu0 0.0
    %200 = vmatpush1.msra.mxu0 0.0
    %201 = vmatprep.subr.mxu0 0.0
    %202 = vmatpush1.msra.mxu0 0.0
    %203 = vmatprep.subr.mxu0 0.0
    %204 = vmatpush1.msra.mxu0 0.0
    %205 = vmatprep.subr.mxu0 0.0
    %206 = vmatpush1.msra.mxu0 0.0
    %207 = vmatprep.mubr.f32.mxu0 0.0
    %208 = vmatmul.mubr.f32.gmra.mrb[0].mxu0 %v120
    %v209 = vpop.f32.mrb[0].mxu0
    %v210 = vadd.f32 %v142, %v209
    %v211 = vpop.f32.mrb[0].mxu0
    %212 = vdwg.mxu0
    %v213 = vmax.f32 %v210, 0.0
    %v214 = vld [vmem:[%s2 + $0x2] sm:$0x1]
    %v215 = vld [vmem:[%s2 + $0x3] sm:$0x1]
    %v216 = vlaneseq
    %v217 = vshrl.u32 %v216, 7
    %v218 = vsub.s32 0, %v217
    %v219 = vrot.slane %v214, %v218
    %v220 = vmul.f32 %v213, %v219
    %221 = vadd.xlane.f32.xlu0 %v220
    %v222 = vpop.xlane.xlu0 %221
    %v223 = vlaneseq
    %v224 = vshrl.u32 %v223, 7
    %v225 = vsub.s32 0, %v224
    %v226 = vrot.slane %v215, %v225
    %v227 = vadd.f32 %v222, %v226
    %v228 = vxor.u32 %v227, 2147483648
    %v229 = vmul.f32 %v228, 1.442695
    %v230 = vpow.pop %v229
    %v231 = vadd.f32 %v230, 1.0
    %v232 = vrcp.pop %v231
    %v233 = vmul.f32 1.0, %v232
    %vm234 = vcmask 7168
    %235 = vst.msk [vmem:[%s3] sm:$0xff] %vm234, %v233
    // Predicated region
    $region18: #{j2_net_forward.1} parent=1 // pred_check
      _
    $region19: #{j2_net_forward.1} parent=1 // pred_check_branch
      %237 = sbr.rel (0) target = $region21
    $region20: #{j2_net_forward.1} parent=1 // pred_region
      _
    $region21: #{j2_net_forward.1} parent=1 // pred_fallthru
      _
    // Predicated region
    $region22: #{j2_net_forward.1} parent=1 // pred_check
      _
    $region23: #{j2_net_forward.1} parent=1 // pred_check_branch
      %239 = sbr.rel (0) target = $region25
    $region24: #{j2_net_forward.1} parent=1 // pred_region
      _
    $region25: #{j2_net_forward.1} parent=1 // pred_fallthru
      _
    %240 = vsyncpa [#allocation3], 1

</llo_original>
